<compile_context>
chip_gen: v5e
topology: v5e:2x2
jax: 0.10.0
libtpu: 0.0.40
codegen_flags: <defaults>
</compile_context>

<pallas_src>
import functools

import jax
import jax.numpy as jnp
from jax import lax
from jax.experimental import pallas as pl
from jax.experimental.pallas import tpu as pltpu

C_PAD = 128          # lane-dense channel padding (every layer width padded to 128)
_BN_EPS = 1e-5


def _round_up(x, m):
    return ((x + m - 1) // m) * m


# ----------------------------------------------------------------------------
# Fused kernel: 4 x (GCN + BN + ReLU) -> global_mean_pool -> Linear -> softmax
# ----------------------------------------------------------------------------
def _fused_gnn_kernel(a_ref, x_ref, w_ref, g_ref, beta_ref,
                      pool_ref, wl_ref, bl_ref, o_ref,
                      *, n_nodes, num_classes):
    a = a_ref[...]                       # (N, N)      bf16  normalized adjacency
    h_in = x_ref[...]                    # (N, C_PAD)  bf16  node features
    inv_n = 1.0 / float(n_nodes)

    h = None
    for i in range(4):
        w = w_ref[i]                     # (C_PAD, C_PAD) bf16, zero padded
        # GCN: H = A_hat @ (H_in @ W).  Both matmuls bf16 on the MXU with f32
        # accumulation.  (Per-channel conv bias is exactly cancelled by the
        # following training-mode BatchNorm, so it is omitted.)
        hw = jnp.dot(h_in, w, preferred_element_type=jnp.float32)
        h = jnp.dot(a, hw.astype(jnp.bfloat16),
                    preferred_element_type=jnp.float32)

        # BatchNorm1d (training-mode batch stats) in one pass over h.
        mean = jnp.sum(h, axis=0, keepdims=True) * inv_n
        ex2 = jnp.sum(h * h, axis=0, keepdims=True) * inv_n
        var = jnp.maximum(ex2 - mean * mean, 0.0)            # clamp E[x^2]-m^2 >= 0
        scale = g_ref[i] * lax.rsqrt(var + _BN_EPS)          # gamma folded in
        shift = beta_ref[i] - mean * scale
        h = jnp.maximum(h * scale + shift, 0.0)              # BN + ReLU
        h_in = h.astype(jnp.bfloat16)                        # next-layer input

    # ---- head: global_mean_pool (as matmul) + Linear + masked softmax -------
    pooled = jnp.dot(pool_ref[...], h, preferred_element_type=jnp.float32)
    logits = jnp.dot(pooled, wl_ref[...],
                     preferred_element_type=jnp.float32) + bl_ref[...]
    col = lax.broadcasted_iota(jnp.int32, logits.shape, 1)
    valid = col < num_classes
    masked = jnp.where(valid, logits, -1e30)                 # ignore padded classes
    m = jnp.max(masked, axis=1, keepdims=True)
    e = jnp.where(valid, jnp.exp(masked - m), 0.0)
    denom = jnp.sum(e, axis=1, keepdims=True)
    o_ref[...] = e * pl.reciprocal(denom, approx=False)


# ----------------------------------------------------------------------------
# Wrapper: pad / stack params, build cost estimate, single pallas_call
# ----------------------------------------------------------------------------
def _pad2(a, rows, cols):
    out = jnp.zeros((rows, cols), a.dtype)
    return out.at[: a.shape[0], : a.shape[1]].set(a)


def _pad_row(a, cols):
    out = jnp.zeros((1, cols), a.dtype)
    return out.at[0, : a.shape[0]].set(a)


def graph_network_forward(params, x, a_hat, pool_mat, *, num_classes):
    n = x.shape[0]
    num_graphs = pool_mat.shape[0]
    assert n % 8 == 0, "node count must be a multiple of 8 (pad nodes outside)"
    b_pad = _round_up(num_graphs, 8)

    layer_keys = ("l1", "l2", "l3", "l4")

    # Pad / stack parameters: conv weights bf16, lane dim padded to 128.
    # Conv biases ("b") are intentionally unused: training-mode BN cancels them.
    w_stack = jnp.stack([_pad2(params[k]["w"], C_PAD, C_PAD)
                         for k in layer_keys]).astype(jnp.bfloat16)  # (4,128,128)
    g_stack = jnp.stack([_pad_row(params[k]["gamma"], C_PAD) for k in layer_keys])
    beta_stack = jnp.stack([_pad_row(params[k]["beta"], C_PAD)
                            for k in layer_keys])                    # (4,1,128) f32

    wl = _pad2(params["head"]["w"], C_PAD, C_PAD)                    # (128,128) f32
    bl = _pad_row(params["head"]["b"], C_PAD)                        # (1,128)   f32

    x_pad = _pad2(x, n, C_PAD).astype(jnp.bfloat16)                  # (N,128) bf16
    a_bf16 = a_hat.astype(jnp.bfloat16)                              # (N,N)   bf16
    pool_pad = _pad2(pool_mat, b_pad, n)                             # (Bpad,N) f32

    operands = (a_bf16, x_pad, w_stack, g_stack, beta_stack,
                pool_pad, wl, bl)

    # Advisory cost estimate for XLA scheduling around the custom call.
    flops = 4 * (2 * n * n * C_PAD + 2 * n * C_PAD * C_PAD)
    flops += 2 * b_pad * n * C_PAD + 2 * b_pad * C_PAD * C_PAD
    bytes_accessed = sum(int(o.size) * o.dtype.itemsize for o in operands)
    bytes_accessed += b_pad * C_PAD * 4
    cost = pl.CostEstimate(flops=int(flops),
                           transcendentals=int(b_pad * C_PAD + 4 * C_PAD),
                           bytes_accessed=int(bytes_accessed))

    kernel = functools.partial(_fused_gnn_kernel, n_nodes=n,
                               num_classes=num_classes)
    out = pl.pallas_call(
        kernel,
        out_shape=jax.ShapeDtypeStruct((b_pad, C_PAD), jnp.float32),
        in_specs=[pl.BlockSpec(memory_space=pltpu.MemorySpace.VMEM)] * len(operands),
        out_specs=pl.BlockSpec(memory_space=pltpu.MemorySpace.VMEM),
        compiler_params=pltpu.CompilerParams(vmem_limit_bytes=32 * 1024 * 1024),
        cost_estimate=cost,
    )(*operands)
    return out[:num_graphs, :num_classes]


# ----------------------------------------------------------------------------
# Glue: normalized adjacency, pooling matrix (plain JAX preprocessing)
# ----------------------------------------------------------------------------
def build_normalized_adjacency(edge_index, num_nodes):
    """A_hat = D^{-1/2} (A + I) D^{-1/2}, A[dst, src] = 1 for each edge."""
    src, dst = edge_index[0], edge_index[1]
    a = jnp.zeros((num_nodes, num_nodes), jnp.float32).at[dst, src].set(1.0)
    a = a + jnp.eye(num_nodes, dtype=jnp.float32)          # add self loops
    deg = jnp.sum(a, axis=1)
    d_inv_sqrt = jnp.where(deg > 0, lax.rsqrt(deg), 0.0)
    return d_inv_sqrt[:, None] * a * d_inv_sqrt[None, :]


def build_pool_matrix(batch, num_graphs, num_nodes):
    """P[g, n] = 1/|graph g| if batch[n] == g else 0  (global_mean_pool)."""
    onehot = (batch[None, :] == jnp.arange(num_graphs)[:, None]).astype(jnp.float32)
    counts = jnp.maximum(jnp.sum(onehot, axis=1, keepdims=True), 1.0)
    return onehot / counts


# ----------------------------------------------------------------------------
# Deterministic parameter construction (same init as before)
# ----------------------------------------------------------------------------
def init_params(key, hidden_channels, input_channels, num_classes):
    dims = [
        (input_channels, hidden_channels),
        (hidden_channels, hidden_channels // 2),
        (hidden_channels // 2, hidden_channels // 4),
        (hidden_channels // 4, hidden_channels // 8),
    ]
    params = {}
    keys = jax.random.split(key, len(dims) + 1)
    for i, (cin, cout) in enumerate(dims):
        kw, kb = jax.random.split(keys[i])
        params[f"l{i + 1}"] = dict(
            w=jax.random.normal(kw, (cin, cout), jnp.float32) * 0.1,
            b=jax.random.normal(kb, (cout,), jnp.float32) * 0.1,  # cancelled by BN
            gamma=jnp.ones((cout,), jnp.float32),   # BatchNorm1d default init
            beta=jnp.zeros((cout,), jnp.float32),
        )
    kw, kb = jax.random.split(keys[-1])
    params["head"] = dict(
        w=jax.random.normal(kw, (hidden_channels // 8, num_classes), jnp.float32) * 0.1,
        b=jax.random.normal(kb, (num_classes,), jnp.float32) * 0.1,
    )
    return params


if __name__ == "__main__":
    # Small synthetic graph batch: 2 graphs x 32 nodes, bidirectional ring edges.
    hidden_channels = 32
    input_channels = 16
    num_classes = 2
    nodes_per_graph = 32
    num_graphs = 2
    num_nodes = nodes_per_graph * num_graphs

    key = jax.random.PRNGKey(0)
    k_x, k_params = jax.random.split(key)

    x = jax.random.normal(k_x, (num_nodes, input_channels), jnp.float32)

    src_list, dst_list = [], []
    for g in range(num_graphs):
        base = g * nodes_per_graph
        for i in range(nodes_per_graph):
            a, b = base + i, base + (i + 1) % nodes_per_graph
            src_list += [a, b]
            dst_list += [b, a]
    edge_index = jnp.array([src_list, dst_list], dtype=jnp.int32)
    batch = jnp.repeat(jnp.arange(num_graphs, dtype=jnp.int32), nodes_per_graph)

    a_hat = build_normalized_adjacency(edge_index, num_nodes)
    pool_mat = build_pool_matrix(batch, num_graphs, num_nodes)
    params = init_params(k_params, hidden_channels, input_channels, num_classes)

    fwd = jax.jit(functools.partial(graph_network_forward, num_classes=num_classes))
    out = fwd(params, x, a_hat, pool_mat)
    out = jax.block_until_ready(out)

    assert out.shape == (num_graphs, num_classes)
    assert bool(jnp.all(jnp.isfinite(out)))
    # Softmax rows must sum to 1.
    assert bool(jnp.all(jnp.abs(jnp.sum(out, axis=1) - 1.0) < 1e-5))
    print("KERNEL_OK")
</pallas_src>

<mosaic_0001>
module attributes {stable_mosaic.version = 11 : i64} {
  func.func @_fused_gnn_kernel(%arg0: memref<64x64xbf16, #tpu.memory_space<vmem>>, %arg1: memref<64x128xbf16, #tpu.memory_space<vmem>>, %arg2: memref<4x128x128xbf16, #tpu.memory_space<vmem>>, %arg3: memref<4x1x128xf32, #tpu.memory_space<vmem>>, %arg4: memref<4x1x128xf32, #tpu.memory_space<vmem>>, %arg5: memref<8x64xf32, #tpu.memory_space<vmem>>, %arg6: memref<128x128xf32, #tpu.memory_space<vmem>>, %arg7: memref<1x128xf32, #tpu.memory_space<vmem>>, %arg8: memref<8x128xf32, #tpu.memory_space<vmem>>) attributes {dimension_semantics = [], scalar_prefetch = 0 : i64, scratch_operands = 0 : i64, tpu.core_type = #tpu.core_type<tc>} {
    %c0 = arith.constant 0 : index
    %c0_0 = arith.constant 0 : index
    %0 = vector.load %arg0[%c0, %c0_0] : memref<64x64xbf16, #tpu.memory_space<vmem>>, vector<64x64xbf16>
    %c0_1 = arith.constant 0 : index
    %c0_2 = arith.constant 0 : index
    %1 = vector.load %arg1[%c0_1, %c0_2] : memref<64x128xbf16, #tpu.memory_space<vmem>>, vector<64x128xbf16>
    %c0_3 = arith.constant 0 : index
    %c0_4 = arith.constant 0 : index
    %c0_5 = arith.constant 0 : index
    %2 = vector.load %arg2[%c0_3, %c0_4, %c0_5] : memref<4x128x128xbf16, #tpu.memory_space<vmem>>, vector<1x128x128xbf16>
    %3 = vector.shape_cast %2 : vector<1x128x128xbf16> to vector<128x128xbf16>
    %cst = arith.constant dense<0.000000e+00> : vector<64x128xf32>
    %4 = tpu.matmul %1, %3, %cst {dimension_numbers = #tpu.dot_dimension_numbers<[1], [0], [0], [1], [0, 0, 1, 1], [], []>} : vector<64x128xbf16>, vector<128x128xbf16>, vector<64x128xf32> -> vector<64x128xf32>
    %5 = arith.truncf %4 : vector<64x128xf32> to vector<64x128xbf16>
    %cst_6 = arith.constant dense<0.000000e+00> : vector<64x128xf32>
    %6 = tpu.matmul %0, %5, %cst_6 {dimension_numbers = #tpu.dot_dimension_numbers<[1], [0], [0], [1], [0, 0, 1, 1], [], []>} : vector<64x64xbf16>, vector<64x128xbf16>, vector<64x128xf32> -> vector<64x128xf32>
    %cst_7 = arith.constant dense<0.000000e+00> : vector<128xf32>
    %7 = vector.multi_reduction <add>, %6, %cst_7 [0] : vector<64x128xf32> to vector<128xf32>
    %8 = vector.shape_cast %7 : vector<128xf32> to vector<1x128xf32>
    %cst_8 = arith.constant 1.562500e-02 : f32
    %9 = vector.broadcast %cst_8 : f32 to vector<1x128xf32>
    %10 = arith.mulf %8, %9 : vector<1x128xf32>
    %11 = arith.mulf %6, %6 : vector<64x128xf32>
    %cst_9 = arith.constant dense<0.000000e+00> : vector<128xf32>
    %12 = vector.multi_reduction <add>, %11, %cst_9 [0] : vector<64x128xf32> to vector<128xf32>
    %13 = vector.shape_cast %12 : vector<128xf32> to vector<1x128xf32>
    %cst_10 = arith.constant 1.562500e-02 : f32
    %14 = vector.broadcast %cst_10 : f32 to vector<1x128xf32>
    %15 = arith.mulf %13, %14 : vector<1x128xf32>
    %16 = arith.mulf %10, %10 : vector<1x128xf32>
    %17 = arith.subf %15, %16 : vector<1x128xf32>
    %cst_11 = arith.constant 0.000000e+00 : f32
    %18 = vector.broadcast %cst_11 : f32 to vector<1x128xf32>
    %19 = arith.maximumf %17, %18 : vector<1x128xf32>
    %c0_12 = arith.constant 0 : index
    %c0_13 = arith.constant 0 : index
    %c0_14 = arith.constant 0 : index
    %20 = vector.load %arg3[%c0_12, %c0_13, %c0_14] : memref<4x1x128xf32, #tpu.memory_space<vmem>>, vector<1x1x128xf32>
    %21 = vector.shape_cast %20 : vector<1x1x128xf32> to vector<1x128xf32>
    %cst_15 = arith.constant 9.99999974E-6 : f32
    %22 = vector.broadcast %cst_15 : f32 to vector<1x128xf32>
    %23 = arith.addf %19, %22 : vector<1x128xf32>
    %24 = math.rsqrt %23 : vector<1x128xf32>
    %25 = arith.mulf %21, %24 : vector<1x128xf32>
    %c0_16 = arith.constant 0 : index
    %c0_17 = arith.constant 0 : index
    %c0_18 = arith.constant 0 : index
    %26 = vector.load %arg4[%c0_16, %c0_17, %c0_18] : memref<4x1x128xf32, #tpu.memory_space<vmem>>, vector<1x1x128xf32>
    %27 = vector.shape_cast %26 : vector<1x1x128xf32> to vector<1x128xf32>
    %28 = arith.mulf %10, %25 : vector<1x128xf32>
    %29 = arith.subf %27, %28 : vector<1x128xf32>
    %30 = vector.broadcast %25 : vector<1x128xf32> to vector<64x128xf32>
    %31 = arith.mulf %6, %30 : vector<64x128xf32>
    %32 = vector.broadcast %29 : vector<1x128xf32> to vector<64x128xf32>
    %33 = arith.addf %31, %32 : vector<64x128xf32>
    %cst_19 = arith.constant 0.000000e+00 : f32
    %34 = vector.broadcast %cst_19 : f32 to vector<64x128xf32>
    %35 = arith.maximumf %33, %34 : vector<64x128xf32>
    %36 = arith.truncf %35 : vector<64x128xf32> to vector<64x128xbf16>
    %c1 = arith.constant 1 : index
    %c0_20 = arith.constant 0 : index
    %c0_21 = arith.constant 0 : index
    %37 = vector.load %arg2[%c1, %c0_20, %c0_21] : memref<4x128x128xbf16, #tpu.memory_space<vmem>>, vector<1x128x128xbf16>
    %38 = vector.shape_cast %37 : vector<1x128x128xbf16> to vector<128x128xbf16>
    %cst_22 = arith.constant dense<0.000000e+00> : vector<64x128xf32>
    %39 = tpu.matmul %36, %38, %cst_22 {dimension_numbers = #tpu.dot_dimension_numbers<[1], [0], [0], [1], [0, 0, 1, 1], [], []>} : vector<64x128xbf16>, vector<128x128xbf16>, vector<64x128xf32> -> vector<64x128xf32>
    %40 = arith.truncf %39 : vector<64x128xf32> to vector<64x128xbf16>
    %cst_23 = arith.constant dense<0.000000e+00> : vector<64x128xf32>
    %41 = tpu.matmul %0, %40, %cst_23 {dimension_numbers = #tpu.dot_dimension_numbers<[1], [0], [0], [1], [0, 0, 1, 1], [], []>} : vector<64x64xbf16>, vector<64x128xbf16>, vector<64x128xf32> -> vector<64x128xf32>
    %cst_24 = arith.constant dense<0.000000e+00> : vector<128xf32>
    %42 = vector.multi_reduction <add>, %41, %cst_24 [0] : vector<64x128xf32> to vector<128xf32>
    %43 = vector.shape_cast %42 : vector<128xf32> to vector<1x128xf32>
    %cst_25 = arith.constant 1.562500e-02 : f32
    %44 = vector.broadcast %cst_25 : f32 to vector<1x128xf32>
    %45 = arith.mulf %43, %44 : vector<1x128xf32>
    %46 = arith.mulf %41, %41 : vector<64x128xf32>
    %cst_26 = arith.constant dense<0.000000e+00> : vector<128xf32>
    %47 = vector.multi_reduction <add>, %46, %cst_26 [0] : vector<64x128xf32> to vector<128xf32>
    %48 = vector.shape_cast %47 : vector<128xf32> to vector<1x128xf32>
    %cst_27 = arith.constant 1.562500e-02 : f32
    %49 = vector.broadcast %cst_27 : f32 to vector<1x128xf32>
    %50 = arith.mulf %48, %49 : vector<1x128xf32>
    %51 = arith.mulf %45, %45 : vector<1x128xf32>
    %52 = arith.subf %50, %51 : vector<1x128xf32>
    %cst_28 = arith.constant 0.000000e+00 : f32
    %53 = vector.broadcast %cst_28 : f32 to vector<1x128xf32>
    %54 = arith.maximumf %52, %53 : vector<1x128xf32>
    %c1_29 = arith.constant 1 : index
    %c0_30 = arith.constant 0 : index
    %c0_31 = arith.constant 0 : index
    %55 = vector.load %arg3[%c1_29, %c0_30, %c0_31] : memref<4x1x128xf32, #tpu.memory_space<vmem>>, vector<1x1x128xf32>
    %56 = vector.shape_cast %55 : vector<1x1x128xf32> to vector<1x128xf32>
    %cst_32 = arith.constant 9.99999974E-6 : f32
    %57 = vector.broadcast %cst_32 : f32 to vector<1x128xf32>
    %58 = arith.addf %54, %57 : vector<1x128xf32>
    %59 = math.rsqrt %58 : vector<1x128xf32>
    %60 = arith.mulf %56, %59 : vector<1x128xf32>
    %c1_33 = arith.constant 1 : index
    %c0_34 = arith.constant 0 : index
    %c0_35 = arith.constant 0 : index
    %61 = vector.load %arg4[%c1_33, %c0_34, %c0_35] : memref<4x1x128xf32, #tpu.memory_space<vmem>>, vector<1x1x128xf32>
    %62 = vector.shape_cast %61 : vector<1x1x128xf32> to vector<1x128xf32>
    %63 = arith.mulf %45, %60 : vector<1x128xf32>
    %64 = arith.subf %62, %63 : vector<1x128xf32>
    %65 = vector.broadcast %60 : vector<1x128xf32> to vector<64x128xf32>
    %66 = arith.mulf %41, %65 : vector<64x128xf32>
    %67 = vector.broadcast %64 : vector<1x128xf32> to vector<64x128xf32>
    %68 = arith.addf %66, %67 : vector<64x128xf32>
    %cst_36 = arith.constant 0.000000e+00 : f32
    %69 = vector.broadcast %cst_36 : f32 to vector<64x128xf32>
    %70 = arith.maximumf %68, %69 : vector<64x128xf32>
    %71 = arith.truncf %70 : vector<64x128xf32> to vector<64x128xbf16>
    %c2 = arith.constant 2 : index
    %c0_37 = arith.constant 0 : index
    %c0_38 = arith.constant 0 : index
    %72 = vector.load %arg2[%c2, %c0_37, %c0_38] : memref<4x128x128xbf16, #tpu.memory_space<vmem>>, vector<1x128x128xbf16>
    %73 = vector.shape_cast %72 : vector<1x128x128xbf16> to vector<128x128xbf16>
    %cst_39 = arith.constant dense<0.000000e+00> : vector<64x128xf32>
    %74 = tpu.matmul %71, %73, %cst_39 {dimension_numbers = #tpu.dot_dimension_numbers<[1], [0], [0], [1], [0, 0, 1, 1], [], []>} : vector<64x128xbf16>, vector<128x128xbf16>, vector<64x128xf32> -> vector<64x128xf32>
    %75 = arith.truncf %74 : vector<64x128xf32> to vector<64x128xbf16>
    %cst_40 = arith.constant dense<0.000000e+00> : vector<64x128xf32>
    %76 = tpu.matmul %0, %75, %cst_40 {dimension_numbers = #tpu.dot_dimension_numbers<[1], [0], [0], [1], [0, 0, 1, 1], [], []>} : vector<64x64xbf16>, vector<64x128xbf16>, vector<64x128xf32> -> vector<64x128xf32>
    %cst_41 = arith.constant dense<0.000000e+00> : vector<128xf32>
    %77 = vector.multi_reduction <add>, %76, %cst_41 [0] : vector<64x128xf32> to vector<128xf32>
    %78 = vector.shape_cast %77 : vector<128xf32> to vector<1x128xf32>
    %cst_42 = arith.constant 1.562500e-02 : f32
    %79 = vector.broadcast %cst_42 : f32 to vector<1x128xf32>
    %80 = arith.mulf %78, %79 : vector<1x128xf32>
    %81 = arith.mulf %76, %76 : vector<64x128xf32>
    %cst_43 = arith.constant dense<0.000000e+00> : vector<128xf32>
    %82 = vector.multi_reduction <add>, %81, %cst_43 [0] : vector<64x128xf32> to vector<128xf32>
    %83 = vector.shape_cast %82 : vector<128xf32> to vector<1x128xf32>
    %cst_44 = arith.constant 1.562500e-02 : f32
    %84 = vector.broadcast %cst_44 : f32 to vector<1x128xf32>
    %85 = arith.mulf %83, %84 : vector<1x128xf32>
    %86 = arith.mulf %80, %80 : vector<1x128xf32>
    %87 = arith.subf %85, %86 : vector<1x128xf32>
    %cst_45 = arith.constant 0.000000e+00 : f32
    %88 = vector.broadcast %cst_45 : f32 to vector<1x128xf32>
    %89 = arith.maximumf %87, %88 : vector<1x128xf32>
    %c2_46 = arith.constant 2 : index
    %c0_47 = arith.constant 0 : index
    %c0_48 = arith.constant 0 : index
    %90 = vector.load %arg3[%c2_46, %c0_47, %c0_48] : memref<4x1x128xf32, #tpu.memory_space<vmem>>, vector<1x1x128xf32>
    %91 = vector.shape_cast %90 : vector<1x1x128xf32> to vector<1x128xf32>
    %cst_49 = arith.constant 9.99999974E-6 : f32
    %92 = vector.broadcast %cst_49 : f32 to vector<1x128xf32>
    %93 = arith.addf %89, %92 : vector<1x128xf32>
    %94 = math.rsqrt %93 : vector<1x128xf32>
    %95 = arith.mulf %91, %94 : vector<1x128xf32>
    %c2_50 = arith.constant 2 : index
    %c0_51 = arith.constant 0 : index
    %c0_52 = arith.constant 0 : index
    %96 = vector.load %arg4[%c2_50, %c0_51, %c0_52] : memref<4x1x128xf32, #tpu.memory_space<vmem>>, vector<1x1x128xf32>
    %97 = vector.shape_cast %96 : vector<1x1x128xf32> to vector<1x128xf32>
    %98 = arith.mulf %80, %95 : vector<1x128xf32>
    %99 = arith.subf %97, %98 : vector<1x128xf32>
    %100 = vector.broadcast %95 : vector<1x128xf32> to vector<64x128xf32>
    %101 = arith.mulf %76, %100 : vector<64x128xf32>
    %102 = vector.broadcast %99 : vector<1x128xf32> to vector<64x128xf32>
    %103 = arith.addf %101, %102 : vector<64x128xf32>
    %cst_53 = arith.constant 0.000000e+00 : f32
    %104 = vector.broadcast %cst_53 : f32 to vector<64x128xf32>
    %105 = arith.maximumf %103, %104 : vector<64x128xf32>
    %106 = arith.truncf %105 : vector<64x128xf32> to vector<64x128xbf16>
    %c3 = arith.constant 3 : index
    %c0_54 = arith.constant 0 : index
    %c0_55 = arith.constant 0 : index
    %107 = vector.load %arg2[%c3, %c0_54, %c0_55] : memref<4x128x128xbf16, #tpu.memory_space<vmem>>, vector<1x128x128xbf16>
    %108 = vector.shape_cast %107 : vector<1x128x128xbf16> to vector<128x128xbf16>
    %cst_56 = arith.constant dense<0.000000e+00> : vector<64x128xf32>
    %109 = tpu.matmul %106, %108, %cst_56 {dimension_numbers = #tpu.dot_dimension_numbers<[1], [0], [0], [1], [0, 0, 1, 1], [], []>} : vector<64x128xbf16>, vector<128x128xbf16>, vector<64x128xf32> -> vector<64x128xf32>
    %110 = arith.truncf %109 : vector<64x128xf32> to vector<64x128xbf16>
    %cst_57 = arith.constant dense<0.000000e+00> : vector<64x128xf32>
    %111 = tpu.matmul %0, %110, %cst_57 {dimension_numbers = #tpu.dot_dimension_numbers<[1], [0], [0], [1], [0, 0, 1, 1], [], []>} : vector<64x64xbf16>, vector<64x128xbf16>, vector<64x128xf32> -> vector<64x128xf32>
    %cst_58 = arith.constant dense<0.000000e+00> : vector<128xf32>
    %112 = vector.multi_reduction <add>, %111, %cst_58 [0] : vector<64x128xf32> to vector<128xf32>
    %113 = vector.shape_cast %112 : vector<128xf32> to vector<1x128xf32>
    %cst_59 = arith.constant 1.562500e-02 : f32
    %114 = vector.broadcast %cst_59 : f32 to vector<1x128xf32>
    %115 = arith.mulf %113, %114 : vector<1x128xf32>
    %116 = arith.mulf %111, %111 : vector<64x128xf32>
    %cst_60 = arith.constant dense<0.000000e+00> : vector<128xf32>
    %117 = vector.multi_reduction <add>, %116, %cst_60 [0] : vector<64x128xf32> to vector<128xf32>
    %118 = vector.shape_cast %117 : vector<128xf32> to vector<1x128xf32>
    %cst_61 = arith.constant 1.562500e-02 : f32
    %119 = vector.broadcast %cst_61 : f32 to vector<1x128xf32>
    %120 = arith.mulf %118, %119 : vector<1x128xf32>
    %121 = arith.mulf %115, %115 : vector<1x128xf32>
    %122 = arith.subf %120, %121 : vector<1x128xf32>
    %cst_62 = arith.constant 0.000000e+00 : f32
    %123 = vector.broadcast %cst_62 : f32 to vector<1x128xf32>
    %124 = arith.maximumf %122, %123 : vector<1x128xf32>
    %c3_63 = arith.constant 3 : index
    %c0_64 = arith.constant 0 : index
    %c0_65 = arith.constant 0 : index
    %125 = vector.load %arg3[%c3_63, %c0_64, %c0_65] : memref<4x1x128xf32, #tpu.memory_space<vmem>>, vector<1x1x128xf32>
    %126 = vector.shape_cast %125 : vector<1x1x128xf32> to vector<1x128xf32>
    %cst_66 = arith.constant 9.99999974E-6 : f32
    %127 = vector.broadcast %cst_66 : f32 to vector<1x128xf32>
    %128 = arith.addf %124, %127 : vector<1x128xf32>
    %129 = math.rsqrt %128 : vector<1x128xf32>
    %130 = arith.mulf %126, %129 : vector<1x128xf32>
    %c3_67 = arith.constant 3 : index
    %c0_68 = arith.constant 0 : index
    %c0_69 = arith.constant 0 : index
    %131 = vector.load %arg4[%c3_67, %c0_68, %c0_69] : memref<4x1x128xf32, #tpu.memory_space<vmem>>, vector<1x1x128xf32>
    %132 = vector.shape_cast %131 : vector<1x1x128xf32> to vector<1x128xf32>
    %133 = arith.mulf %115, %130 : vector<1x128xf32>
    %134 = arith.subf %132, %133 : vector<1x128xf32>
    %135 = vector.broadcast %130 : vector<1x128xf32> to vector<64x128xf32>
    %136 = arith.mulf %111, %135 : vector<64x128xf32>
    %137 = vector.broadcast %134 : vector<1x128xf32> to vector<64x128xf32>
    %138 = arith.addf %136, %137 : vector<64x128xf32>
    %cst_70 = arith.constant 0.000000e+00 : f32
    %139 = vector.broadcast %cst_70 : f32 to vector<64x128xf32>
    %140 = arith.maximumf %138, %139 : vector<64x128xf32>
    %c0_71 = arith.constant 0 : index
    %c0_72 = arith.constant 0 : index
    %141 = vector.load %arg5[%c0_71, %c0_72] : memref<8x64xf32, #tpu.memory_space<vmem>>, vector<8x64xf32>
    %cst_73 = arith.constant dense<0.000000e+00> : vector<8x128xf32>
    %142 = tpu.matmul %141, %140, %cst_73 {dimension_numbers = #tpu.dot_dimension_numbers<[1], [0], [0], [1], [0, 0, 1, 1], [], []>} : vector<8x64xf32>, vector<64x128xf32>, vector<8x128xf32> -> vector<8x128xf32>
    %c0_74 = arith.constant 0 : index
    %c0_75 = arith.constant 0 : index
    %143 = vector.load %arg6[%c0_74, %c0_75] : memref<128x128xf32, #tpu.memory_space<vmem>>, vector<128x128xf32>
    %cst_76 = arith.constant dense<0.000000e+00> : vector<8x128xf32>
    %144 = tpu.matmul %142, %143, %cst_76 {dimension_numbers = #tpu.dot_dimension_numbers<[1], [0], [0], [1], [0, 0, 1, 1], [], []>} : vector<8x128xf32>, vector<128x128xf32>, vector<8x128xf32> -> vector<8x128xf32>
    %c0_77 = arith.constant 0 : index
    %c0_78 = arith.constant 0 : index
    %145 = vector.load %arg7[%c0_77, %c0_78] : memref<1x128xf32, #tpu.memory_space<vmem>>, vector<1x128xf32>
    %146 = vector.broadcast %145 : vector<1x128xf32> to vector<8x128xf32>
    %147 = arith.addf %144, %146 : vector<8x128xf32>
    %148 = tpu.iota {dimensions = array<i32: 1>} : vector<8x128xi32>
    %c2_i32 = arith.constant 2 : i32
    %149 = vector.broadcast %c2_i32 : i32 to vector<8x128xi32>
    %150 = arith.cmpi slt, %148, %149 : vector<8x128xi32>
    %cst_79 = arith.constant -1.000000e+30 : f32
    %151 = vector.broadcast %cst_79 : f32 to vector<8x128xf32>
    %152 = arith.select %150, %147, %151 : vector<8x128xi1>, vector<8x128xf32>
    %cst_80 = arith.constant dense<0xFF800000> : vector<8xf32>
    %153 = vector.multi_reduction <maximumf>, %152, %cst_80 [1] : vector<8x128xf32> to vector<8xf32>
    %154 = vector.shape_cast %153 : vector<8xf32> to vector<8x1xf32>
    %155 = vector.broadcast %154 : vector<8x1xf32> to vector<8x128xf32>
    %156 = arith.subf %152, %155 : vector<8x128xf32>
    %157 = math.exp %156 : vector<8x128xf32>
    %cst_81 = arith.constant 0.000000e+00 : f32
    %158 = vector.broadcast %cst_81 : f32 to vector<8x128xf32>
    %159 = arith.select %150, %157, %158 : vector<8x128xi1>, vector<8x128xf32>
    %cst_82 = arith.constant dense<0.000000e+00> : vector<8xf32>
    %160 = vector.multi_reduction <add>, %159, %cst_82 [1] : vector<8x128xf32> to vector<8xf32>
    %161 = vector.shape_cast %160 : vector<8xf32> to vector<8x1xf32>
    %162 = tpu.reciprocal %161 : vector<8x1xf32> -> vector<8x1xf32>
    %163 = vector.broadcast %162 : vector<8x1xf32> to vector<8x128xf32>
    %164 = arith.mulf %159, %163 : vector<8x128xf32>
    %c0_83 = arith.constant 0 : index
    %c0_84 = arith.constant 0 : index
    %165 = vector.load %arg8[%c0_83, %c0_84] : memref<8x128xf32, #tpu.memory_space<vmem>>, vector<8x128xf32>
    tpu.vector_store %arg8[%c0_83, %c0_84], %164 {strides = array<i32>} : memref<8x128xf32, #tpu.memory_space<vmem>>, vector<8x128xf32>,
    return
  }
}

</mosaic_0001>

<llo_original>
// kernel: graph_network_forward.1
$region0: #{graph_network_forward.1}
  #allocation0 [shape = 'u32[]', space=smem, size = 0x4, offset = 0x4, fixed_abs, tag = 'smem constant byte address 0x4 - core index']
  #allocation1 [shape = 'u32[72,128]{1,0:T(1,128)}', space=vmem, size = 0x9000, scoped, tag = 'internal scratch']
  %s0 = inlined_call_operand.vmem [shape: bf16[64,64], index: 0, kind: input, shape index: {}]
  %s1 = inlined_call_operand.vmem [shape: bf16[64,128], index: 1, kind: input, shape index: {}]
  %s2 = inlined_call_operand.vmem [shape: bf16[4,128,128], index: 2, kind: input, shape index: {}]
  %s3 = inlined_call_operand.vmem [shape: f32[4,1,128], index: 3, kind: input, shape index: {}]
  %s4 = inlined_call_operand.vmem [shape: f32[4,1,128], index: 4, kind: input, shape index: {}]
  %s5 = inlined_call_operand.vmem [shape: f32[8,64], index: 5, kind: input, shape index: {}]
  %s6 = inlined_call_operand.vmem [shape: f32[128,128], index: 6, kind: input, shape index: {}]
  %s7 = inlined_call_operand.vmem [shape: f32[1,128], index: 7, kind: input, shape index: {}]
  %s8 = inlined_call_operand.vmem [shape: f32[8,128], index: 8, kind: output, shape index: {}]
  %s9 = sld [smem:[#allocation0]]
  $region42: #{graph_network_forward.1} parent=0
    _
  %s11 = ssub.s32 1, %s9
  %s12 = scalar_select 0, %s11, %s9
  // Predicated region
  $region2: #{graph_network_forward.1} parent=0 // pred_check
    _
  $region3: #{graph_network_forward.1} parent=0 // pred_check_branch
    %14 = sbr.rel (0) target = $region5
  $region4: #{graph_network_forward.1} parent=0 // pred_region
    _
  $region5: #{graph_network_forward.1} parent=0 // pred_fallthru
    _
  // Predicated region
  $region6: #{graph_network_forward.1} parent=0 // pred_check
    _
  $region7: #{graph_network_forward.1} parent=0 // pred_check_branch
    %16 = sbr.rel (0) target = $region9
  $region8: #{graph_network_forward.1} parent=0 // pred_region
    _
  $region9: #{graph_network_forward.1} parent=0 // pred_fallthru
    _
  // Predicated region
  $region10: #{graph_network_forward.1} parent=0 // pred_check
    _
  $region11: #{graph_network_forward.1} parent=0 // pred_check_branch
    %18 = sbr.rel (0) target = $region13
  $region12: #{graph_network_forward.1} parent=0 // pred_region
    _
  $region13: #{graph_network_forward.1} parent=0 // pred_fallthru
    _
  // Predicated region
  $region14: #{graph_network_forward.1} parent=0 // pred_check
    _
  $region15: #{graph_network_forward.1} parent=0 // pred_check_branch
    %20 = sbr.rel (0) target = $region17
  $region16: #{graph_network_forward.1} parent=0 // pred_region
    _
  $region17: #{graph_network_forward.1} parent=0 // pred_fallthru
    _
  // Predicated region
  $region18: #{graph_network_forward.1} parent=0 // pred_check
    _
  $region19: #{graph_network_forward.1} parent=0 // pred_check_branch
    %22 = sbr.rel (0) target = $region21
  $region20: #{graph_network_forward.1} parent=0 // pred_region
    _
  $region21: #{graph_network_forward.1} parent=0 // pred_fallthru
    _
  // Predicated region
  $region22: #{graph_network_forward.1} parent=0 // pred_check
    _
  $region23: #{graph_network_forward.1} parent=0 // pred_check_branch
    %24 = sbr.rel (0) target = $region25
  $region24: #{graph_network_forward.1} parent=0 // pred_region
    _
  $region25: #{graph_network_forward.1} parent=0 // pred_fallthru
    _
  // Predicated region
  $region26: #{graph_network_forward.1} parent=0 // pred_check
    _
  $region27: #{graph_network_forward.1} parent=0 // pred_check_branch
    %26 = sbr.rel (0) target = $region29
  $region28: #{graph_network_forward.1} parent=0 // pred_region
    _
  $region29: #{graph_network_forward.1} parent=0 // pred_fallthru
    _
  // Predicated region
  $region30: #{graph_network_forward.1} parent=0 // pred_check
    _
  $region31: #{graph_network_forward.1} parent=0 // pred_check_branch
    %28 = sbr.rel (0) target = $region33
  $region32: #{graph_network_forward.1} parent=0 // pred_region
    _
  $region33: #{graph_network_forward.1} parent=0 // pred_fallthru
    _
  %v30 = vld [vmem:[%s0] sm:$0xf]
  %v31 = vld [vmem:[%s0 + $0x4] sm:$0xf]
  %v32 = vld [vmem:[%s0 + $0x8] sm:$0xf]
  %v33 = vld [vmem:[%s0 + $0xc] sm:$0xf]
  %v34 = vld [vmem:[%s0 + $0x10] sm:$0xf]
  %v35 = vld [vmem:[%s0 + $0x14] sm:$0xf]
  %v36 = vld [vmem:[%s0 + $0x18] sm:$0xf]
  %v37 = vld [vmem:[%s0 + $0x1c] sm:$0xf]
  %v38 = vld [vmem:[%s1] sm:$0xf]
  %v39 = vld [vmem:[%s1 + $0x4] sm:$0xf]
  %v40 = vld [vmem:[%s1 + $0x8] sm:$0xf]
  %v41 = vld [vmem:[%s1 + $0xc] sm:$0xf]
  %v42 = vld [vmem:[%s1 + $0x10] sm:$0xf]
  %v43 = vld [vmem:[%s1 + $0x14] sm:$0xf]
  %v44 = vld [vmem:[%s1 + $0x18] sm:$0xf]
  %v45 = vld [vmem:[%s1 + $0x1c] sm:$0xf]
  %v46 = vld [vmem:[%s2] sm:$0xf]
  %v47 = vld [vmem:[%s2 + $0x4] sm:$0xf]
  %v48 = vld [vmem:[%s2 + $0x8] sm:$0xf]
  %v49 = vld [vmem:[%s2 + $0xc] sm:$0xf]
  %v50 = vld [vmem:[%s2 + $0x10] sm:$0xf]
  %v51 = vld [vmem:[%s2 + $0x14] sm:$0xf]
  %v52 = vld [vmem:[%s2 + $0x18] sm:$0xf]
  %v53 = vld [vmem:[%s2 + $0x1c] sm:$0xf]
  %v54 = vld [vmem:[%s2 + $0x20] sm:$0xf]
  %v55 = vld [vmem:[%s2 + $0x24] sm:$0xf]
  %v56 = vld [vmem:[%s2 + $0x28] sm:$0xf]
  %v57 = vld [vmem:[%s2 + $0x2c] sm:$0xf]
  %v58 = vld [vmem:[%s2 + $0x30] sm:$0xf]
  %v59 = vld [vmem:[%s2 + $0x34] sm:$0xf]
  %v60 = vld [vmem:[%s2 + $0x38] sm:$0xf]
  %v61 = vld [vmem:[%s2 + $0x3c] sm:$0xf]
  %v70 = vunpack.c.l.b16 %v38
  %v71 = vunpack.c.l.b16 %v39
  %v72 = vunpack.c.l.b16 %v40
  %v73 = vunpack.c.l.b16 %v41
  %v74 = vunpack.c.l.b16 %v42
  %v75 = vunpack.c.l.b16 %v43
  %v76 = vunpack.c.l.b16 %v44
  %v77 = vunpack.c.l.b16 %v45
  %v78 = vpack.c.b16 %v71, %v70
  %v79 = vpack.c.b16 %v73, %v72
  %v80 = vpack.c.b16 %v75, %v74
  %v81 = vpack.c.b16 %v77, %v76
  %v102 = vunpack.c.l.b16 %v46
  %v103 = vunpack.c.l.b16 %v47
  %v104 = vunpack.c.l.b16 %v48
  %v105 = vunpack.c.l.b16 %v49
  %v106 = vunpack.c.l.b16 %v50
  %v107 = vunpack.c.l.b16 %v51
  %v108 = vunpack.c.l.b16 %v52
  %v109 = vunpack.c.l.b16 %v53
  %v110 = vunpack.c.l.b16 %v54
  %v111 = vunpack.c.l.b16 %v55
  %v112 = vunpack.c.l.b16 %v56
  %v113 = vunpack.c.l.b16 %v57
  %v114 = vunpack.c.l.b16 %v58
  %v115 = vunpack.c.l.b16 %v59
  %v116 = vunpack.c.l.b16 %v60
  %v117 = vunpack.c.l.b16 %v61
  %v118 = vpack.c.b16 %v103, %v102
  %v119 = vpack.c.b16 %v105, %v104
  %v120 = vpack.c.b16 %v107, %v106
  %v121 = vpack.c.b16 %v109, %v108
  %v122 = vpack.c.b16 %v111, %v110
  %v123 = vpack.c.b16 %v113, %v112
  %v124 = vpack.c.b16 %v115, %v114
  %v125 = vpack.c.b16 %v117, %v116
  %134 = vmatpush.bf16.msra.mxu0 %v125
  %135 = vmatpush.bf16.msra.mxu0 %v124
  %136 = vmatpush.bf16.msra.mxu0 %v123
  %137 = vmatpush.bf16.msra.mxu0 %v122
  %138 = vmatpush.bf16.msra.mxu0 %v121
  %139 = vmatpush.bf16.msra.mxu0 %v120
  %140 = vmatpush.bf16.msra.mxu0 %v119
  %141 = vmatpush.bf16.msra.mxu0 %v118
  %142 = vmatmul.bf16.gmra.mxu0 %v78
  %v143 = vpop.f32.mrf.mxu0
  %v144 = vadd.f32 0.0, %v143
  %v145 = vpop.f32.mrf.mxu0
  %v146 = vadd.f32 0.0, %v145
  %147 = vmatmul.bf16.gmra.mxu0 %v79
  %v148 = vpop.f32.mrf.mxu0
  %v149 = vadd.f32 0.0, %v148
  %v150 = vpop.f32.mrf.mxu0
  %v151 = vadd.f32 0.0, %v150
  %152 = vmatmul.bf16.gmra.mxu0 %v80
  %v153 = vpop.f32.mrf.mxu0
  %v154 = vadd.f32 0.0, %v153
  %v155 = vpop.f32.mrf.mxu0
  %v156 = vadd.f32 0.0, %v155
  %157 = vmatmul.bf16.gmra.mxu0 %v81
  %v158 = vpop.f32.mrf.mxu0
  %v159 = vadd.f32 0.0, %v158
  %v160 = vpop.f32.mrf.mxu0
  %v161 = vadd.f32 0.0, %v160
  %162 = vdwg.mxu0
  %v163 = vpack.c.bf16 %v146, %v144
  %v164 = vpack.c.bf16 %v151, %v149
  %v165 = vpack.c.bf16 %v156, %v154
  %v166 = vpack.c.bf16 %v161, %v159
  %v175 = vunpack.c.l.b16 %v30
  %v176 = vunpack.c.l.b16 %v31
  %v177 = vunpack.c.l.b16 %v32
  %v178 = vunpack.c.l.b16 %v33
  %v179 = vunpack.c.l.b16 %v34
  %v180 = vunpack.c.l.b16 %v35
  %v181 = vunpack.c.l.b16 %v36
  %v182 = vunpack.c.l.b16 %v37
  %v183 = vpack.c.b16 %v176, %v175
  %v184 = vpack.c.b16 %v178, %v177
  %v185 = vpack.c.b16 %v180, %v179
  %v186 = vpack.c.b16 %v182, %v181
  %vm187 = vcmask 523264
  %v189 = vsel %vm187, %v183, 0
  %v192 = vsel %vm187, %v184, 0
  %v195 = vsel %vm187, %v185, 0
  %v198 = vsel %vm187, %v186, 0
  %200 = vmatpush.bf16.msra.mxu0 0
  %201 = vmatpush.bf16.msra.mxu0 0
  %202 = vmatpush.bf16.msra.mxu0 0
  %203 = vmatpush.bf16.msra.mxu0 0
  %204 = vmatpush.bf16.msra.mxu0 %v166
  %205 = vmatpush.bf16.msra.mxu0 %v165
  %206 = vmatpush.bf16.msra.mxu0 %v164
  %207 = vmatpush.bf16.msra.mxu0 %v163
  %208 = vmatmul.bf16.gmra.mxu0 %v189
  %v209 = vpop.f32.mrf.mxu0
  %v210 = vadd.f32 0.0, %v209
  %v211 = vpop.f32.mrf.mxu0
  %v212 = vadd.f32 0.0, %v211
  %213 = vmatmul.bf16.gmra.mxu0 %v192
  %v214 = vpop.f32.mrf.mxu0
  %v215 = vadd.f32 0.0, %v214
  %v216 = vpop.f32.mrf.mxu0
  %v217 = vadd.f32 0.0, %v216
  %218 = vmatmul.bf16.gmra.mxu0 %v195
  %v219 = vpop.f32.mrf.mxu0
  %v220 = vadd.f32 0.0, %v219
  %v221 = vpop.f32.mrf.mxu0
  %v222 = vadd.f32 0.0, %v221
  %223 = vmatmul.bf16.gmra.mxu0 %v198
  %v224 = vpop.f32.mrf.mxu0
  %v225 = vadd.f32 0.0, %v224
  %v226 = vpop.f32.mrf.mxu0
  %v227 = vadd.f32 0.0, %v226
  %228 = vdwg.mxu0
  %v229 = vadd.f32 %v210, %v212
  %v230 = vadd.f32 %v229, %v215
  %v231 = vadd.f32 %v230, %v217
  %v232 = vadd.f32 %v231, %v220
  %v233 = vadd.f32 %v232, %v222
  %v234 = vadd.f32 %v233, %v225
  %v235 = vadd.f32 %v234, %v227
  %v236 = vrot.slane %v235, 4
  %v237 = vadd.f32 %v235, %v236
  %v238 = vrot.slane %v237, 2
  %v239 = vadd.f32 %v237, %v238
  %v240 = vrot.slane %v239, 1
  %v241 = vadd.f32 %v239, %v240
  %v242 = vmul.f32 %v241, 0.015625
  %v243 = vmul.f32 %v210, %v210
  %v244 = vmul.f32 %v212, %v212
  %v245 = vmul.f32 %v215, %v215
  %v246 = vmul.f32 %v217, %v217
  %v247 = vmul.f32 %v220, %v220
  %v248 = vmul.f32 %v222, %v222
  %v249 = vmul.f32 %v225, %v225
  %v250 = vmul.f32 %v227, %v227
  %v251 = vadd.f32 %v243, %v244
  %v252 = vadd.f32 %v251, %v245
  %v253 = vadd.f32 %v252, %v246
  %v254 = vadd.f32 %v253, %v247
  %v255 = vadd.f32 %v254, %v248
  %v256 = vadd.f32 %v255, %v249
  %v257 = vadd.f32 %v256, %v250
  %v258 = vrot.slane %v257, 4
  %v259 = vadd.f32 %v257, %v258
  %v260 = vrot.slane %v259, 2
  %v261 = vadd.f32 %v259, %v260
  %v262 = vrot.slane %v261, 1
  %v263 = vadd.f32 %v261, %v262
  %v264 = vmul.f32 %v263, 0.015625
  %v265 = vmul.f32 %v242, %v242
  %v266 = vsub.f32 %v264, %v265
  %v267 = vmax.f32 %v266, 0.0
  %v268 = vld [vmem:[%s3] sm:$0x1]
  %v269 = vadd.f32 %v267, 1e-05
  %v270 = vrsqrt.pop %v269
  %v271 = vmul.f32 %v270, %v269
  %v272 = vmul.f32 %v271, %v270
  %v273 = vmul.f32 0.5, %v272
  %v274 = vsub.f32 1.5, %v273
  %v275 = vmul.f32 %v270, %v274
  %vm276 = vweird.f32 %v269
  %vm277 = vweird.f32 %v270
  %vm278 = vmor %vm276, %vm277
  %v279 = vsel %vm278, %v270, %v275
  %v280 = vmul.f32 %v268, %v279
  %v281 = vld [vmem:[%s4] sm:$0x1]
  %v282 = vmul.f32 %v242, %v280
  %v283 = vsub.f32 %v281, %v282
  %v285 = vperm.slane %v280, 0
  %v287 = vmul.f32 %v210, %v285
  %v288 = vmul.f32 %v212, %v285
  %v289 = vmul.f32 %v215, %v285
  %v290 = vmul.f32 %v217, %v285
  %v291 = vmul.f32 %v220, %v285
  %v292 = vmul.f32 %v222, %v285
  %v293 = vmul.f32 %v225, %v285
  %v294 = vmul.f32 %v227, %v285
  %v296 = vperm.slane %v283, 0
  %v298 = vadd.f32 %v287, %v296
  %v299 = vadd.f32 %v288, %v296
  %v300 = vadd.f32 %v289, %v296
  %v301 = vadd.f32 %v290, %v296
  %v302 = vadd.f32 %v291, %v296
  %v303 = vadd.f32 %v292, %v296
  %v304 = vadd.f32 %v293, %v296
  %v305 = vadd.f32 %v294, %v296
  %v306 = vmax.f32 %v298, 0.0
  %v307 = vmax.f32 %v299, 0.0
  %v308 = vmax.f32 %v300, 0.0
  %v309 = vmax.f32 %v301, 0.0
  %v310 = vmax.f32 %v302, 0.0
  %v311 = vmax.f32 %v303, 0.0
  %v312 = vmax.f32 %v304, 0.0
  %v313 = vmax.f32 %v305, 0.0
  %v314 = vpack.c.bf16 %v307, %v306
  %v315 = vpack.c.bf16 %v309, %v308
  %v316 = vpack.c.bf16 %v311, %v310
  %v317 = vpack.c.bf16 %v313, %v312
  %s318 = scalar_lea.vmem %s2, 64
  %v319 = vld [vmem:[%s318] sm:$0xf]
  %v320 = vld [vmem:[%s318 + $0x4] sm:$0xf]
  %v321 = vld [vmem:[%s318 + $0x8] sm:$0xf]
  %v322 = vld [vmem:[%s318 + $0xc] sm:$0xf]
  %v323 = vld [vmem:[%s318 + $0x10] sm:$0xf]
  %v324 = vld [vmem:[%s318 + $0x14] sm:$0xf]
  %v325 = vld [vmem:[%s318 + $0x18] sm:$0xf]
  %v326 = vld [vmem:[%s318 + $0x1c] sm:$0xf]
  %v327 = vld [vmem:[%s318 + $0x20] sm:$0xf]
  %v328 = vld [vmem:[%s318 + $0x24] sm:$0xf]
  %v329 = vld [vmem:[%s318 + $0x28] sm:$0xf]
  %v330 = vld [vmem:[%s318 + $0x2c] sm:$0xf]
  %v331 = vld [vmem:[%s318 + $0x30] sm:$0xf]
  %v332 = vld [vmem:[%s318 + $0x34] sm:$0xf]
  %v333 = vld [vmem:[%s318 + $0x38] sm:$0xf]
  %v334 = vld [vmem:[%s318 + $0x3c] sm:$0xf]
  %v351 = vunpack.c.l.b16 %v319
  %v352 = vunpack.c.l.b16 %v320
  %v353 = vunpack.c.l.b16 %v321
  %v354 = vunpack.c.l.b16 %v322
  %v355 = vunpack.c.l.b16 %v323
  %v356 = vunpack.c.l.b16 %v324
  %v357 = vunpack.c.l.b16 %v325
  %v358 = vunpack.c.l.b16 %v326
  %v359 = vunpack.c.l.b16 %v327
  %v360 = vunpack.c.l.b16 %v328
  %v361 = vunpack.c.l.b16 %v329
  %v362 = vunpack.c.l.b16 %v330
  %v363 = vunpack.c.l.b16 %v331
  %v364 = vunpack.c.l.b16 %v332
  %v365 = vunpack.c.l.b16 %v333
  %v366 = vunpack.c.l.b16 %v334
  %v367 = vpack.c.b16 %v352, %v351
  %v368 = vpack.c.b16 %v354, %v353
  %v369 = vpack.c.b16 %v356, %v355
  %v370 = vpack.c.b16 %v358, %v357
  %v371 = vpack.c.b16 %v360, %v359
  %v372 = vpack.c.b16 %v362, %v361
  %v373 = vpack.c.b16 %v364, %v363
  %v374 = vpack.c.b16 %v366, %v365
  %383 = vmatpush.bf16.msra.mxu0 %v374
  %384 = vmatpush.bf16.msra.mxu0 %v373
  %385 = vmatpush.bf16.msra.mxu0 %v372
  %386 = vmatpush.bf16.msra.mxu0 %v371
  %387 = vmatpush.bf16.msra.mxu0 %v370
  %388 = vmatpush.bf16.msra.mxu0 %v369
  %389 = vmatpush.bf16.msra.mxu0 %v368
  %390 = vmatpush.bf16.msra.mxu0 %v367
  %391 = vmatmul.bf16.gmra.mxu0 %v314
  %v392 = vpop.f32.mrf.mxu0
  %v393 = vadd.f32 0.0, %v392
  %v394 = vpop.f32.mrf.mxu0
  %v395 = vadd.f32 0.0, %v394
  %396 = vmatmul.bf16.gmra.mxu0 %v315
  %v397 = vpop.f32.mrf.mxu0
  %v398 = vadd.f32 0.0, %v397
  %v399 = vpop.f32.mrf.mxu0
  %v400 = vadd.f32 0.0, %v399
  %401 = vmatmul.bf16.gmra.mxu0 %v316
  %v402 = vpop.f32.mrf.mxu0
  %v403 = vadd.f32 0.0, %v402
  %v404 = vpop.f32.mrf.mxu0
  %v405 = vadd.f32 0.0, %v404
  %406 = vmatmul.bf16.gmra.mxu0 %v317
  %v407 = vpop.f32.mrf.mxu0
  %v408 = vadd.f32 0.0, %v407
  %v409 = vpop.f32.mrf.mxu0
  %v410 = vadd.f32 0.0, %v409
  %411 = vdwg.mxu0
  %v412 = vpack.c.bf16 %v395, %v393
  %v413 = vpack.c.bf16 %v400, %v398
  %v414 = vpack.c.bf16 %v405, %v403
  %v415 = vpack.c.bf16 %v410, %v408
  %416 = vmatpush.bf16.msra.mxu0 0
  %417 = vmatpush.bf16.msra.mxu0 0
  %418 = vmatpush.bf16.msra.mxu0 0
  %419 = vmatpush.bf16.msra.mxu0 0
  %420 = vmatpush.bf16.msra.mxu0 %v415
  %421 = vmatpush.bf16.msra.mxu0 %v414
  %422 = vmatpush.bf16.msra.mxu0 %v413
  %423 = vmatpush.bf16.msra.mxu0 %v412
  %424 = vmatmul.bf16.gmra.mxu0 %v189
  %v425 = vpop.f32.mrf.mxu0
  %v426 = vadd.f32 0.0, %v425
  %v427 = vpop.f32.mrf.mxu0
  %v428 = vadd.f32 0.0, %v427
  %429 = vmatmul.bf16.gmra.mxu0 %v192
  %v430 = vpop.f32.mrf.mxu0
  %v431 = vadd.f32 0.0, %v430
  %v432 = vpop.f32.mrf.mxu0
  %v433 = vadd.f32 0.0, %v432
  %434 = vmatmul.bf16.gmra.mxu0 %v195
  %v435 = vpop.f32.mrf.mxu0
  %v436 = vadd.f32 0.0, %v435
  %v437 = vpop.f32.mrf.mxu0
  %v438 = vadd.f32 0.0, %v437
  %439 = vmatmul.bf16.gmra.mxu0 %v198
  %v440 = vpop.f32.mrf.mxu0
  %v441 = vadd.f32 0.0, %v440
  %v442 = vpop.f32.mrf.mxu0
  %v443 = vadd.f32 0.0, %v442
  %444 = vdwg.mxu0
  %v445 = vadd.f32 %v426, %v428
  %v446 = vadd.f32 %v445, %v431
  %v447 = vadd.f32 %v446, %v433
  %v448 = vadd.f32 %v447, %v436
  %v449 = vadd.f32 %v448, %v438
  %v450 = vadd.f32 %v449, %v441
  %v451 = vadd.f32 %v450, %v443
  %v452 = vrot.slane %v451, 4
  %v453 = vadd.f32 %v451, %v452
  %v454 = vrot.slane %v453, 2
  %v455 = vadd.f32 %v453, %v454
  %v456 = vrot.slane %v455, 1
  %v457 = vadd.f32 %v455, %v456
  %v458 = vmul.f32 %v457, 0.015625
  %v459 = vmul.f32 %v426, %v426
  %v460 = vmul.f32 %v428, %v428
  %v461 = vmul.f32 %v431, %v431
  %v462 = vmul.f32 %v433, %v433
  %v463 = vmul.f32 %v436, %v436
  %v464 = vmul.f32 %v438, %v438
  %v465 = vmul.f32 %v441, %v441
  %v466 = vmul.f32 %v443, %v443
  %v467 = vadd.f32 %v459, %v460
  %v468 = vadd.f32 %v467, %v461
  %v469 = vadd.f32 %v468, %v462
  %v470 = vadd.f32 %v469, %v463
  %v471 = vadd.f32 %v470, %v464
  %v472 = vadd.f32 %v471, %v465
  %v473 = vadd.f32 %v472, %v466
  %v474 = vrot.slane %v473, 4
  %v475 = vadd.f32 %v473, %v474
  %v476 = vrot.slane %v475, 2
  %v477 = vadd.f32 %v475, %v476
  %v478 = vrot.slane %v477, 1
  %v479 = vadd.f32 %v477, %v478
  %v480 = vmul.f32 %v479, 0.015625
  %v481 = vmul.f32 %v458, %v458
  %v482 = vsub.f32 %v480, %v481
  %v483 = vmax.f32 %v482, 0.0
  %s484 = scalar_lea.vmem %s3, 1
  %v485 = vld [vmem:[%s484] sm:$0x1]
  %v486 = vadd.f32 %v483, 1e-05
  %v487 = vrsqrt.pop %v486
  %v488 = vmul.f32 %v487, %v486
  %v489 = vmul.f32 %v488, %v487
  %v490 = vmul.f32 0.5, %v489
  %v491 = vsub.f32 1.5, %v490
  %v492 = vmul.f32 %v487, %v491
  %vm493 = vweird.f32 %v486
  %vm494 = vweird.f32 %v487
  %vm495 = vmor %vm493, %vm494
  %v496 = vsel %vm495, %v487, %v492
  %v497 = vmul.f32 %v485, %v496
  %s498 = scalar_lea.vmem %s4, 1
  %v499 = vld [vmem:[%s498] sm:$0x1]
  %v500 = vmul.f32 %v458, %v497
  %v501 = vsub.f32 %v499, %v500
  %v503 = vperm.slane %v497, 0
  %v505 = vmul.f32 %v426, %v503
  %v506 = vmul.f32 %v428, %v503
  %v507 = vmul.f32 %v431, %v503
  %v508 = vmul.f32 %v433, %v503
  %v509 = vmul.f32 %v436, %v503
  %v510 = vmul.f32 %v438, %v503
  %v511 = vmul.f32 %v441, %v503
  %v512 = vmul.f32 %v443, %v503
  %v514 = vperm.slane %v501, 0
  %v516 = vadd.f32 %v505, %v514
  %v517 = vadd.f32 %v506, %v514
  %v518 = vadd.f32 %v507, %v514
  %v519 = vadd.f32 %v508, %v514
  %v520 = vadd.f32 %v509, %v514
  %v521 = vadd.f32 %v510, %v514
  %v522 = vadd.f32 %v511, %v514
  %v523 = vadd.f32 %v512, %v514
  %v524 = vmax.f32 %v516, 0.0
  %v525 = vmax.f32 %v517, 0.0
  %v526 = vmax.f32 %v518, 0.0
  %v527 = vmax.f32 %v519, 0.0
  %v528 = vmax.f32 %v520, 0.0
  %v529 = vmax.f32 %v521, 0.0
  %v530 = vmax.f32 %v522, 0.0
  %v531 = vmax.f32 %v523, 0.0
  %v532 = vpack.c.bf16 %v525, %v524
  %v533 = vpack.c.bf16 %v527, %v526
  %v534 = vpack.c.bf16 %v529, %v528
  %v535 = vpack.c.bf16 %v531, %v530
  %s536 = scalar_lea.vmem %s2, 128
  %v537 = vld [vmem:[%s536] sm:$0xf]
  %v538 = vld [vmem:[%s536 + $0x4] sm:$0xf]
  %v539 = vld [vmem:[%s536 + $0x8] sm:$0xf]
  %v540 = vld [vmem:[%s536 + $0xc] sm:$0xf]
  %v541 = vld [vmem:[%s536 + $0x10] sm:$0xf]
  %v542 = vld [vmem:[%s536 + $0x14] sm:$0xf]
  %v543 = vld [vmem:[%s536 + $0x18] sm:$0xf]
  %v544 = vld [vmem:[%s536 + $0x1c] sm:$0xf]
  %v545 = vld [vmem:[%s536 + $0x20] sm:$0xf]
  %v546 = vld [vmem:[%s536 + $0x24] sm:$0xf]
  %v547 = vld [vmem:[%s536 + $0x28] sm:$0xf]
  %v548 = vld [vmem:[%s536 + $0x2c] sm:$0xf]
  %v549 = vld [vmem:[%s536 + $0x30] sm:$0xf]
  %v550 = vld [vmem:[%s536 + $0x34] sm:$0xf]
  %v551 = vld [vmem:[%s536 + $0x38] sm:$0xf]
  %v552 = vld [vmem:[%s536 + $0x3c] sm:$0xf]
  %v569 = vunpack.c.l.b16 %v537
  %v570 = vunpack.c.l.b16 %v538
  %v571 = vunpack.c.l.b16 %v539
  %v572 = vunpack.c.l.b16 %v540
  %v573 = vunpack.c.l.b16 %v541
  %v574 = vunpack.c.l.b16 %v542
  %v575 = vunpack.c.l.b16 %v543
  %v576 = vunpack.c.l.b16 %v544
  %v577 = vunpack.c.l.b16 %v545
  %v578 = vunpack.c.l.b16 %v546
  %v579 = vunpack.c.l.b16 %v547
  %v580 = vunpack.c.l.b16 %v548
  %v581 = vunpack.c.l.b16 %v549
  %v582 = vunpack.c.l.b16 %v550
  %v583 = vunpack.c.l.b16 %v551
  %v584 = vunpack.c.l.b16 %v552
  %v585 = vpack.c.b16 %v570, %v569
  %v586 = vpack.c.b16 %v572, %v571
  %v587 = vpack.c.b16 %v574, %v573
  %v588 = vpack.c.b16 %v576, %v575
  %v589 = vpack.c.b16 %v578, %v577
  %v590 = vpack.c.b16 %v580, %v579
  %v591 = vpack.c.b16 %v582, %v581
  %v592 = vpack.c.b16 %v584, %v583
  %601 = vmatpush.bf16.msra.mxu0 %v592
  %602 = vmatpush.bf16.msra.mxu0 %v591
  %603 = vmatpush.bf16.msra.mxu0 %v590
  %604 = vmatpush.bf16.msra.mxu0 %v589
  %605 = vmatpush.bf16.msra.mxu0 %v588
  %606 = vmatpush.bf16.msra.mxu0 %v587
  %607 = vmatpush.bf16.msra.mxu0 %v586
  %608 = vmatpush.bf16.msra.mxu0 %v585
  %609 = vmatmul.bf16.gmra.mxu0 %v532
  %v610 = vpop.f32.mrf.mxu0
  %v611 = vadd.f32 0.0, %v610
  %v612 = vpop.f32.mrf.mxu0
  %v613 = vadd.f32 0.0, %v612
  %614 = vmatmul.bf16.gmra.mxu0 %v533
  %v615 = vpop.f32.mrf.mxu0
  %v616 = vadd.f32 0.0, %v615
  %v617 = vpop.f32.mrf.mxu0
  %v618 = vadd.f32 0.0, %v617
  %619 = vmatmul.bf16.gmra.mxu0 %v534
  %v620 = vpop.f32.mrf.mxu0
  %v621 = vadd.f32 0.0, %v620
  %v622 = vpop.f32.mrf.mxu0
  %v623 = vadd.f32 0.0, %v622
  %624 = vmatmul.bf16.gmra.mxu0 %v535
  %v625 = vpop.f32.mrf.mxu0
  %v626 = vadd.f32 0.0, %v625
  %v627 = vpop.f32.mrf.mxu0
  %v628 = vadd.f32 0.0, %v627
  %629 = vdwg.mxu0
  %v630 = vpack.c.bf16 %v613, %v611
  %v631 = vpack.c.bf16 %v618, %v616
  %v632 = vpack.c.bf16 %v623, %v621
  %v633 = vpack.c.bf16 %v628, %v626
  %634 = vmatpush.bf16.msra.mxu0 0
  %635 = vmatpush.bf16.msra.mxu0 0
  %636 = vmatpush.bf16.msra.mxu0 0
  %637 = vmatpush.bf16.msra.mxu0 0
  %638 = vmatpush.bf16.msra.mxu0 %v633
  %639 = vmatpush.bf16.msra.mxu0 %v632
  %640 = vmatpush.bf16.msra.mxu0 %v631
  %641 = vmatpush.bf16.msra.mxu0 %v630
  %642 = vmatmul.bf16.gmra.mxu0 %v189
  %v643 = vpop.f32.mrf.mxu0
  %v644 = vadd.f32 0.0, %v643
  %v645 = vpop.f32.mrf.mxu0
  %v646 = vadd.f32 0.0, %v645
  %647 = vmatmul.bf16.gmra.mxu0 %v192
  %v648 = vpop.f32.mrf.mxu0
  %v649 = vadd.f32 0.0, %v648
  %v650 = vpop.f32.mrf.mxu0
  %v651 = vadd.f32 0.0, %v650
  %652 = vmatmul.bf16.gmra.mxu0 %v195
  %v653 = vpop.f32.mrf.mxu0
  %v654 = vadd.f32 0.0, %v653
  %v655 = vpop.f32.mrf.mxu0
  %v656 = vadd.f32 0.0, %v655
  %657 = vmatmul.bf16.gmra.mxu0 %v198
  %v658 = vpop.f32.mrf.mxu0
  %v659 = vadd.f32 0.0, %v658
  %v660 = vpop.f32.mrf.mxu0
  %v661 = vadd.f32 0.0, %v660
  %662 = vdwg.mxu0
  %v663 = vadd.f32 %v644, %v646
  %v664 = vadd.f32 %v663, %v649
  %v665 = vadd.f32 %v664, %v651
  %v666 = vadd.f32 %v665, %v654
  %v667 = vadd.f32 %v666, %v656
  %v668 = vadd.f32 %v667, %v659
  %v669 = vadd.f32 %v668, %v661
  %v670 = vrot.slane %v669, 4
  %v671 = vadd.f32 %v669, %v670
  %v672 = vrot.slane %v671, 2
  %v673 = vadd.f32 %v671, %v672
  %v674 = vrot.slane %v673, 1
  %v675 = vadd.f32 %v673, %v674
  %v676 = vmul.f32 %v675, 0.015625
  %v677 = vmul.f32 %v644, %v644
  %v678 = vmul.f32 %v646, %v646
  %v679 = vmul.f32 %v649, %v649
  %v680 = vmul.f32 %v651, %v651
  %v681 = vmul.f32 %v654, %v654
  %v682 = vmul.f32 %v656, %v656
  %v683 = vmul.f32 %v659, %v659
  %v684 = vmul.f32 %v661, %v661
  %v685 = vadd.f32 %v677, %v678
  %v686 = vadd.f32 %v685, %v679
  %v687 = vadd.f32 %v686, %v680
  %v688 = vadd.f32 %v687, %v681
  %v689 = vadd.f32 %v688, %v682
  %v690 = vadd.f32 %v689, %v683
  %v691 = vadd.f32 %v690, %v684
  %v692 = vrot.slane %v691, 4
  %v693 = vadd.f32 %v691, %v692
  %v694 = vrot.slane %v693, 2
  %v695 = vadd.f32 %v693, %v694
  %v696 = vrot.slane %v695, 1
  %v697 = vadd.f32 %v695, %v696
  %v698 = vmul.f32 %v697, 0.015625
  %v699 = vmul.f32 %v676, %v676
  %v700 = vsub.f32 %v698, %v699
  %v701 = vmax.f32 %v700, 0.0
  %s702 = scalar_lea.vmem %s3, 2
  %v703 = vld [vmem:[%s702] sm:$0x1]
  %v704 = vadd.f32 %v701, 1e-05
  %v705 = vrsqrt.pop %v704
  %v706 = vmul.f32 %v705, %v704
  %v707 = vmul.f32 %v706, %v705
  %v708 = vmul.f32 0.5, %v707
  %v709 = vsub.f32 1.5, %v708
  %v710 = vmul.f32 %v705, %v709
  %vm711 = vweird.f32 %v704
  %vm712 = vweird.f32 %v705
  %vm713 = vmor %vm711, %vm712
  %v714 = vsel %vm713, %v705, %v710
  %v715 = vmul.f32 %v703, %v714
  %s716 = scalar_lea.vmem %s4, 2
  %v717 = vld [vmem:[%s716] sm:$0x1]
  %v718 = vmul.f32 %v676, %v715
  %v719 = vsub.f32 %v717, %v718
  %v721 = vperm.slane %v715, 0
  %v723 = vmul.f32 %v644, %v721
  %v724 = vmul.f32 %v646, %v721
  %v725 = vmul.f32 %v649, %v721
  %v726 = vmul.f32 %v651, %v721
  %v727 = vmul.f32 %v654, %v721
  %v728 = vmul.f32 %v656, %v721
  %v729 = vmul.f32 %v659, %v721
  %v730 = vmul.f32 %v661, %v721
  %v732 = vperm.slane %v719, 0
  %v734 = vadd.f32 %v723, %v732
  %v735 = vadd.f32 %v724, %v732
  %v736 = vadd.f32 %v725, %v732
  %v737 = vadd.f32 %v726, %v732
  %v738 = vadd.f32 %v727, %v732
  %v739 = vadd.f32 %v728, %v732
  %v740 = vadd.f32 %v729, %v732
  %v741 = vadd.f32 %v730, %v732
  %v742 = vmax.f32 %v734, 0.0
  %v743 = vmax.f32 %v735, 0.0
  %v744 = vmax.f32 %v736, 0.0
  %v745 = vmax.f32 %v737, 0.0
  %v746 = vmax.f32 %v738, 0.0
  %v747 = vmax.f32 %v739, 0.0
  %v748 = vmax.f32 %v740, 0.0
  %v749 = vmax.f32 %v741, 0.0
  %v750 = vpack.c.bf16 %v743, %v742
  %v751 = vpack.c.bf16 %v745, %v744
  %v752 = vpack.c.bf16 %v747, %v746
  %v753 = vpack.c.bf16 %v749, %v748
  %s754 = scalar_lea.vmem %s2, 192
  %v755 = vld [vmem:[%s754] sm:$0xf]
  %v756 = vld [vmem:[%s754 + $0x4] sm:$0xf]
  %v757 = vld [vmem:[%s754 + $0x8] sm:$0xf]
  %v758 = vld [vmem:[%s754 + $0xc] sm:$0xf]
  %v759 = vld [vmem:[%s754 + $0x10] sm:$0xf]
  %v760 = vld [vmem:[%s754 + $0x14] sm:$0xf]
  %v761 = vld [vmem:[%s754 + $0x18] sm:$0xf]
  %v762 = vld [vmem:[%s754 + $0x1c] sm:$0xf]
  %v763 = vld [vmem:[%s754 + $0x20] sm:$0xf]
  %v764 = vld [vmem:[%s754 + $0x24] sm:$0xf]
  %v765 = vld [vmem:[%s754 + $0x28] sm:$0xf]
  %v766 = vld [vmem:[%s754 + $0x2c] sm:$0xf]
  %v767 = vld [vmem:[%s754 + $0x30] sm:$0xf]
  %v768 = vld [vmem:[%s754 + $0x34] sm:$0xf]
  %v769 = vld [vmem:[%s754 + $0x38] sm:$0xf]
  %v770 = vld [vmem:[%s754 + $0x3c] sm:$0xf]
  %v787 = vunpack.c.l.b16 %v755
  %v788 = vunpack.c.l.b16 %v756
  %v789 = vunpack.c.l.b16 %v757
  %v790 = vunpack.c.l.b16 %v758
  %v791 = vunpack.c.l.b16 %v759
  %v792 = vunpack.c.l.b16 %v760
  %v793 = vunpack.c.l.b16 %v761
  %v794 = vunpack.c.l.b16 %v762
  %v795 = vunpack.c.l.b16 %v763
  %v796 = vunpack.c.l.b16 %v764
  %v797 = vunpack.c.l.b16 %v765
  %v798 = vunpack.c.l.b16 %v766
  %v799 = vunpack.c.l.b16 %v767
  %v800 = vunpack.c.l.b16 %v768
  %v801 = vunpack.c.l.b16 %v769
  %v802 = vunpack.c.l.b16 %v770
  %v803 = vpack.c.b16 %v788, %v787
  %v804 = vpack.c.b16 %v790, %v789
  %v805 = vpack.c.b16 %v792, %v791
  %v806 = vpack.c.b16 %v794, %v793
  %v807 = vpack.c.b16 %v796, %v795
  %v808 = vpack.c.b16 %v798, %v797
  %v809 = vpack.c.b16 %v800, %v799
  %v810 = vpack.c.b16 %v802, %v801
  %819 = vmatpush.bf16.msra.mxu0 %v810
  %820 = vmatpush.bf16.msra.mxu0 %v809
  %821 = vmatpush.bf16.msra.mxu0 %v808
  %822 = vmatpush.bf16.msra.mxu0 %v807
  %823 = vmatpush.bf16.msra.mxu0 %v806
  %824 = vmatpush.bf16.msra.mxu0 %v805
  %825 = vmatpush.bf16.msra.mxu0 %v804
  %826 = vmatpush.bf16.msra.mxu0 %v803
  %827 = vmatmul.bf16.gmra.mxu0 %v750
  %v828 = vpop.f32.mrf.mxu0
  %v829 = vadd.f32 0.0, %v828
  %v830 = vpop.f32.mrf.mxu0
  %v831 = vadd.f32 0.0, %v830
  %832 = vmatmul.bf16.gmra.mxu0 %v751
  %v833 = vpop.f32.mrf.mxu0
  %v834 = vadd.f32 0.0, %v833
  %v835 = vpop.f32.mrf.mxu0
  %v836 = vadd.f32 0.0, %v835
  %837 = vmatmul.bf16.gmra.mxu0 %v752
  %v838 = vpop.f32.mrf.mxu0
  %v839 = vadd.f32 0.0, %v838
  %v840 = vpop.f32.mrf.mxu0
  %v841 = vadd.f32 0.0, %v840
  %842 = vmatmul.bf16.gmra.mxu0 %v753
  %v843 = vpop.f32.mrf.mxu0
  %v844 = vadd.f32 0.0, %v843
  %v845 = vpop.f32.mrf.mxu0
  %v846 = vadd.f32 0.0, %v845
  %847 = vdwg.mxu0
  %v848 = vpack.c.bf16 %v831, %v829
  %v849 = vpack.c.bf16 %v836, %v834
  %v850 = vpack.c.bf16 %v841, %v839
  %v851 = vpack.c.bf16 %v846, %v844
  %852 = vmatpush.bf16.msra.mxu0 0
  %853 = vmatpush.bf16.msra.mxu0 0
  %854 = vmatpush.bf16.msra.mxu0 0
  %855 = vmatpush.bf16.msra.mxu0 0
  %856 = vmatpush.bf16.msra.mxu0 %v851
  %857 = vmatpush.bf16.msra.mxu0 %v850
  %858 = vmatpush.bf16.msra.mxu0 %v849
  %859 = vmatpush.bf16.msra.mxu0 %v848
  %860 = vmatmul.bf16.gmra.mxu0 %v189
  %v861 = vpop.f32.mrf.mxu0
  %v862 = vadd.f32 0.0, %v861
  %v863 = vpop.f32.mrf.mxu0
  %v864 = vadd.f32 0.0, %v863
  %865 = vmatmul.bf16.gmra.mxu0 %v192
  %v866 = vpop.f32.mrf.mxu0
  %v867 = vadd.f32 0.0, %v866
  %v868 = vpop.f32.mrf.mxu0
  %v869 = vadd.f32 0.0, %v868
  %870 = vmatmul.bf16.gmra.mxu0 %v195
  %v871 = vpop.f32.mrf.mxu0
  %v872 = vadd.f32 0.0, %v871
  %v873 = vpop.f32.mrf.mxu0
  %v874 = vadd.f32 0.0, %v873
  %875 = vmatmul.bf16.gmra.mxu0 %v198
  %v876 = vpop.f32.mrf.mxu0
  %v877 = vadd.f32 0.0, %v876
  %v878 = vpop.f32.mrf.mxu0
  %v879 = vadd.f32 0.0, %v878
  %880 = vdwg.mxu0
  %v881 = vadd.f32 %v862, %v864
  %v882 = vadd.f32 %v881, %v867
  %v883 = vadd.f32 %v882, %v869
  %v884 = vadd.f32 %v883, %v872
  %v885 = vadd.f32 %v884, %v874
  %v886 = vadd.f32 %v885, %v877
  %v887 = vadd.f32 %v886, %v879
  %v888 = vrot.slane %v887, 4
  %v889 = vadd.f32 %v887, %v888
  %v890 = vrot.slane %v889, 2
  %v891 = vadd.f32 %v889, %v890
  %v892 = vrot.slane %v891, 1
  %v893 = vadd.f32 %v891, %v892
  %v894 = vmul.f32 %v893, 0.015625
  %v895 = vmul.f32 %v862, %v862
  %v896 = vmul.f32 %v864, %v864
  %v897 = vmul.f32 %v867, %v867
  %v898 = vmul.f32 %v869, %v869
  %v899 = vmul.f32 %v872, %v872
  %v900 = vmul.f32 %v874, %v874
  %v901 = vmul.f32 %v877, %v877
  %v902 = vmul.f32 %v879, %v879
  %v903 = vadd.f32 %v895, %v896
  %v904 = vadd.f32 %v903, %v897
  %v905 = vadd.f32 %v904, %v898
  %v906 = vadd.f32 %v905, %v899
  %v907 = vadd.f32 %v906, %v900
  %v908 = vadd.f32 %v907, %v901
  %v909 = vadd.f32 %v908, %v902
  %v910 = vrot.slane %v909, 4
  %v911 = vadd.f32 %v909, %v910
  %v912 = vrot.slane %v911, 2
  %v913 = vadd.f32 %v911, %v912
  %v914 = vrot.slane %v913, 1
  %v915 = vadd.f32 %v913, %v914
  %v916 = vmul.f32 %v915, 0.015625
  %v917 = vmul.f32 %v894, %v894
  %v918 = vsub.f32 %v916, %v917
  %v919 = vmax.f32 %v918, 0.0
  %s920 = scalar_lea.vmem %s3, 3
  %v921 = vld [vmem:[%s920] sm:$0x1]
  %v922 = vadd.f32 %v919, 1e-05
  %v923 = vrsqrt.pop %v922
  %v924 = vmul.f32 %v923, %v922
  %v925 = vmul.f32 %v924, %v923
  %v926 = vmul.f32 0.5, %v925
  %v927 = vsub.f32 1.5, %v926
  %v928 = vmul.f32 %v923, %v927
  %vm929 = vweird.f32 %v922
  %vm930 = vweird.f32 %v923
  %vm931 = vmor %vm929, %vm930
  %v932 = vsel %vm931, %v923, %v928
  %v933 = vmul.f32 %v921, %v932
  %s934 = scalar_lea.vmem %s4, 3
  %v935 = vld [vmem:[%s934] sm:$0x1]
  %v936 = vmul.f32 %v894, %v933
  %v937 = vsub.f32 %v935, %v936
  %v939 = vperm.slane %v933, 0
  %v941 = vmul.f32 %v862, %v939
  %v942 = vmul.f32 %v864, %v939
  %v943 = vmul.f32 %v867, %v939
  %v944 = vmul.f32 %v869, %v939
  %v945 = vmul.f32 %v872, %v939
  %v946 = vmul.f32 %v874, %v939
  %v947 = vmul.f32 %v877, %v939
  %v948 = vmul.f32 %v879, %v939
  %v950 = vperm.slane %v937, 0
  %v952 = vadd.f32 %v941, %v950
  %v953 = vadd.f32 %v942, %v950
  %v954 = vadd.f32 %v943, %v950
  %v955 = vadd.f32 %v944, %v950
  %v956 = vadd.f32 %v945, %v950
  %v957 = vadd.f32 %v946, %v950
  %v958 = vadd.f32 %v947, %v950
  %v959 = vadd.f32 %v948, %v950
  %v960 = vmax.f32 %v952, 0.0
  %v961 = vmax.f32 %v953, 0.0
  %v962 = vmax.f32 %v954, 0.0
  %v963 = vmax.f32 %v955, 0.0
  %v964 = vmax.f32 %v956, 0.0
  %v965 = vmax.f32 %v957, 0.0
  %v966 = vmax.f32 %v958, 0.0
  %v967 = vmax.f32 %v959, 0.0
  %v968 = vld [vmem:[%s5] sm:$0xff]
  %v970 = vsel %vm187, %v968, 0
  %972 = vmatpush.msra.mxu0 0.0
  %973 = vmatpush.msra.mxu0 0.0
  %974 = vmatpush.msra.mxu0 0.0
  %975 = vmatpush.msra.mxu0 0.0
  %976 = vmatpush.msra.mxu0 0.0
  %977 = vmatpush.msra.mxu0 0.0
  %978 = vmatpush.msra.mxu0 0.0
  %979 = vmatpush.msra.mxu0 0.0
  %980 = vmatpush.msra.mxu0 %v967
  %981 = vmatpush.msra.mxu0 %v966
  %982 = vmatpush.msra.mxu0 %v965
  %983 = vmatpush.msra.mxu0 %v964
  %984 = vmatpush.msra.mxu0 %v963
  %985 = vmatpush.msra.mxu0 %v962
  %986 = vmatpush.msra.mxu0 %v961
  %987 = vmatpush.msra.mxu0 %v960
  %988 = vmatmul.f32.gmra.mxu0 %v970
  %v989 = vpop.f32.mrf.mxu0
  %v990 = vadd.f32 0.0, %v989
  %991 = vdwg.mxu0
  %v992 = vld [vmem:[%s6] sm:$0xff]
  %v993 = vld [vmem:[%s6 + $0x8] sm:$0xff]
  %v994 = vld [vmem:[%s6 + $0x10] sm:$0xff]
  %v995 = vld [vmem:[%s6 + $0x18] sm:$0xff]
  %v996 = vld [vmem:[%s6 + $0x20] sm:$0xff]
  %v997 = vld [vmem:[%s6 + $0x28] sm:$0xff]
  %v998 = vld [vmem:[%s6 + $0x30] sm:$0xff]
  %v999 = vld [vmem:[%s6 + $0x38] sm:$0xff]
  %v1000 = vld [vmem:[%s6 + $0x40] sm:$0xff]
  %v1001 = vld [vmem:[%s6 + $0x48] sm:$0xff]
  %v1002 = vld [vmem:[%s6 + $0x50] sm:$0xff]
  %v1003 = vld [vmem:[%s6 + $0x58] sm:$0xff]
  %v1004 = vld [vmem:[%s6 + $0x60] sm:$0xff]
  %v1005 = vld [vmem:[%s6 + $0x68] sm:$0xff]
  %v1006 = vld [vmem:[%s6 + $0x70] sm:$0xff]
  %v1007 = vld [vmem:[%s6 + $0x78] sm:$0xff]
  %v1008 = vld [vmem:[%s7] sm:$0x1]
  %v1010 = vperm.slane %v1008, 0
  %1012 = vmatpush.msra.mxu0 %v1007
  %1013 = vmatpush.msra.mxu0 %v1006
  %1014 = vmatpush.msra.mxu0 %v1005
  %1015 = vmatpush.msra.mxu0 %v1004
  %1016 = vmatpush.msra.mxu0 %v1003
  %1017 = vmatpush.msra.mxu0 %v1002
  %1018 = vmatpush.msra.mxu0 %v1001
  %1019 = vmatpush.msra.mxu0 %v1000
  %1020 = vmatpush.msra.mxu0 %v999
  %1021 = vmatpush.msra.mxu0 %v998
  %1022 = vmatpush.msra.mxu0 %v997
  %1023 = vmatpush.msra.mxu0 %v996
  %1024 = vmatpush.msra.mxu0 %v995
  %1025 = vmatpush.msra.mxu0 %v994
  %1026 = vmatpush.msra.mxu0 %v993
  %1027 = vmatpush.msra.mxu0 %v992
  %1028 = vmatmul.f32.gmra.mxu0 %v990
  %v1029 = vpop.f32.mrf.mxu0
  %v1030 = vadd.f32 %v1010, %v1029
  %1031 = vdwg.mxu0
  %v1032 = vlaneseq
  %v1033 = vand.u32 %v1032, 127
  %vm1034 = vcmp.lt.s32.totalorder %v1033, 2
  %v1035 = vsel %vm1034, %v1030, -1e+30
  %1036 = vmax.xlane.f32.xlu0 %v1035
  %v1037 = vpop.xlane.xlu0 %1036
  %v1038 = vsub.f32 %v1035, %v1037
  %v1039 = vmul.f32 %v1038, 1.442695
  %v1040 = vpow.pop %v1039
  %v1041 = vsel %vm1034, %v1040, 0.0
  %1042 = vadd.xlane.f32.xlu0 %v1041
  %v1043 = vpop.xlane.xlu0 %1042
  %v1044 = vrcp.pop %v1043
  %v1045 = vmul.f32 %v1043, %v1044
  %v1046 = vsub.f32 1.0, %v1045
  %v1047 = vmul.f32 %v1044, %v1046
  %v1048 = vadd.f32 %v1044, %v1047
  %vm1049 = vweird.f32 %v1043
  %vm1050 = vweird.f32 %v1044
  %vm1051 = vmor %vm1049, %vm1050
  %v1052 = vsel %vm1051, %v1044, %v1048
  %v1053 = vand.u32 2147483647, %v1043
  %vm1054 = vcmp.eq.f32.partialorder %v1053, 8.507059e+37
  %v1055 = vand.u32 %v1043, 2147483648
  %v1056 = vor.u32 1.1754944e-38, %v1055
  %v1057 = vsel %vm1054, %v1056, %v1052
  %v1058 = vmul.f32 %v1041, %v1057
  %1059 = vst [vmem:[%s8] sm:$0xff] %v1058
  // Predicated region
  $region34: #{graph_network_forward.1} parent=0 // pred_check
    _
  $region35: #{graph_network_forward.1} parent=0 // pred_check_branch
    %1061 = sbr.rel (0) target = $region37
  $region36: #{graph_network_forward.1} parent=0 // pred_region
    _
  $region37: #{graph_network_forward.1} parent=0 // pred_fallthru
    _
  // Predicated region
  $region38: #{graph_network_forward.1} parent=0 // pred_check
    _
  $region39: #{graph_network_forward.1} parent=0 // pred_check_branch
    %1063 = sbr.rel (0) target = $region41
  $region40: #{graph_network_forward.1} parent=0 // pred_region
    _
  $region41: #{graph_network_forward.1} parent=0 // pred_fallthru
    _

</llo_original>
